<compile_context>
chip_gen: v5e
topology: v5e:2x2
jax: 0.10.0
libtpu: 0.0.40
codegen_flags: <defaults>
</compile_context>

<pallas_src>
import jax
import jax.numpy as jnp
from jax.experimental import pallas as pl
from jax.experimental.pallas import tpu as pltpu


# --------------------------------------------------------------------------------------
# Hardware-aware tuning knobs.
# --------------------------------------------------------------------------------------

def _vmem_capacity_bytes(default=64 << 20):
    try:
        info = pltpu.get_tpu_info()
        for attr in ("vmem_capacity_bytes", "vmem_size_bytes", "vmem_bytes"):
            v = getattr(info, attr, None)
            if v:
                return int(v)
    except Exception:
        pass
    return default


def _budgets():
    """(vmem_limit_bytes, attention tile budget, stage-1 row-tile cap)."""
    phys = _vmem_capacity_bytes()
    if phys >= (100 << 20):              # v5e / v6e: 128 MiB physical VMEM
        return 64 << 20, 24 << 20, 512
    return 40 << 20, 14 << 20, 256       # v7x: 64 MiB per TensorCore (or unknown)


def _row_tile(m, cap):
    for t in (512, 256, 128, 64, 32, 16, 8):
        if t <= cap and t <= m and m % t == 0:
            return t
    return m


def _key_tile(lk):
    for t in (512, 256, 128):
        if lk % t == 0:
            return t
    return lk


def _pick_q_tile(lq, lk, a, dv, *, ebytes, budget_bytes, has_dense_mask):
    """Largest Lq tile whose double-buffered per-step footprint fits the budget."""
    cands = [t for t in (512, 256, 128, 64, 32, 16, 8) if t <= lq and lq % t == 0]
    if not cands:
        # TODO(synk): ragged Lq falls back to a full-extent block (may exceed budget).
        return lq
    resident = 2 * 4 * (a * lk + lk * dv)                      # kpt + values (f32-counted)
    for t in cands:
        per_tile = ebytes * t * a + 4 * t * dv + 4 * t * lk
        if has_dense_mask:
            per_tile += t * lk                                  # int8 mask
        if resident + 2 * per_tile + 4 * t * lk <= budget_bytes:
            return t
    return cands[-1]


def _ensure_parallel_iters(tq, lq, batch, min_iters=2):
    """Shrink tq if needed so B * (Lq // tq) >= 2 (keeps both v7x TensorCores busy)."""
    while (batch * (lq // tq) < min_iters and tq > 8 and tq % 2 == 0
           and (tq // 2) % 8 == 0 and lq % (tq // 2) == 0):
        tq //= 2
    return tq


def _pick_lk_chunk(lk_pad, tq, max_elems=16 * 1024):
    """Lane-chunk size: keep the (tq, lkc) f32 energy accumulator ~<= 16 vregs."""
    if lk_pad <= 128:
        return lk_pad
    best = None
    for c in (512, 256, 128):
        if lk_pad % c == 0:
            best = c
            if tq * c <= max_elems:
                return c
    return best if best is not None else lk_pad


def _pad_dim(x, axis, multiple):
    pad = (-x.shape[axis]) % multiple
    if pad == 0:
        return x
    widths = [(0, 0)] * x.ndim
    widths[axis] = (0, pad)
    return jnp.pad(x, widths)


# --------------------------------------------------------------------------------------
# Stage 1: input projections (hoisted out of the attention grid, MXU matmuls).
# --------------------------------------------------------------------------------------

def _proj_bias_kernel(x_ref, w_ref, b_ref, o_ref):
    o_ref[...] = (jnp.dot(x_ref[...], w_ref[...], preferred_element_type=jnp.float32)
                  + b_ref[...]).astype(o_ref.dtype)


def _proj_keys_t_kernel(k_ref, w_ref, o_ref):
    # (A, tk) = Wk^T @ keys_tile^T — the transpose is fused into the projection kernel
    # (no wrapper-level HBM round trip); f32 accumulation on the MXU.
    o_ref[0] = jax.lax.dot_general(
        w_ref[...], k_ref[0],
        dimension_numbers=(((0,), (1,)), ((), ())),
        preferred_element_type=jnp.float32).astype(o_ref.dtype)


def _project_rows(x2d, w, b, *, out_dtype, cap, vmem_limit):
    m, h = x2d.shape
    a = w.shape[1]
    tm = _row_tile(m, cap)
    return pl.pallas_call(
        _proj_bias_kernel,
        out_shape=jax.ShapeDtypeStruct((m, a), out_dtype),
        grid_spec=pltpu.PrefetchScalarGridSpec(
            num_scalar_prefetch=0,
            grid=(m // tm,),
            in_specs=[pl.BlockSpec((tm, h), lambda i: (i, 0)),
                      pl.BlockSpec((h, a), lambda i: (0, 0)),
                      pl.BlockSpec((1, a), lambda i: (0, 0))],
            out_specs=pl.BlockSpec((tm, a), lambda i: (i, 0))),
        compiler_params=pltpu.CompilerParams(
            dimension_semantics=("parallel",), vmem_limit_bytes=vmem_limit),
    )(x2d, w, b)


def _project_keys_t(keys3d, w, *, out_dtype, vmem_limit):
    b, lk, h = keys3d.shape
    a = w.shape[1]
    tk = _key_tile(lk)
    return pl.pallas_call(
        _proj_keys_t_kernel,
        out_shape=jax.ShapeDtypeStruct((b, a, lk), out_dtype),
        grid_spec=pltpu.PrefetchScalarGridSpec(
            num_scalar_prefetch=0,
            grid=(b, lk // tk),
            in_specs=[pl.BlockSpec((1, tk, h), lambda bi, i: (bi, i, 0)),
                      pl.BlockSpec((h, a), lambda bi, i: (0, 0))],
            out_specs=pl.BlockSpec((1, a, tk), lambda bi, i: (bi, 0, i))),
        compiler_params=pltpu.CompilerParams(
            dimension_semantics=("parallel", "parallel"), vmem_limit_bytes=vmem_limit),
    )(keys3d, w)


# --------------------------------------------------------------------------------------
# Stage 2: attention (energies + softmax + context), grid = (B, Lq // tq).
# --------------------------------------------------------------------------------------

def _attn_body(qp_ref, kpt_ref, v_ref, w2_ref, b2_ref, ctx_ref, attn_ref, kill_mask):
    tq = qp_ref.shape[1]
    attn_dim = qp_ref.shape[2]
    lk_pad = kpt_ref.shape[2]

    qp = qp_ref[0]                                    # (tq, A)  energy dtype
    lkc = _pick_lk_chunk(lk_pad, tq)

    # Additive-attention energies.  Lk is processed in lane chunks small enough that the
    # (tq, lkc) f32 accumulator stays in vregs across the (unrolled) A sweep — the scores
    # plane is never loaded/stored through VMEM per A step.  Per A step: lane-broadcast
    # (tq,1) + sublane-broadcast (1,lkc) add, EUP tanh, scalar multiply-accumulate (f32).
    chunks = []
    for c0 in range(0, lk_pad, lkc):
        k_chunk = kpt_ref[0, :, c0:c0 + lkc]          # (A, lkc) key projection, transposed
        acc = jnp.full((tq, lkc), b2_ref[0], dtype=jnp.float32)
        for a in range(attn_dim):                     # static unroll over A
            acc = acc + w2_ref[a] * jnp.tanh(qp[:, a:a + 1] + k_chunk[a:a + 1, :])
        chunks.append(acc)
    scores = chunks[0] if len(chunks) == 1 else jnp.concatenate(chunks, axis=-1)

    if kill_mask is not None:
        # Large finite negative (not -inf): fully-masked rows degrade to a uniform
        # distribution instead of NaN.
        scores = jnp.where(kill_mask, jnp.float32(-1e30), scores)

    # Softmax over keys (Lk resident in full -> exact single-pass softmax).
    smax = jnp.max(scores, axis=-1, keepdims=True)
    ex = jnp.exp(scores - smax)
    den = jnp.sum(ex, axis=-1, keepdims=True)
    inv = pl.reciprocal(den, approx=False)            # exact: attention rows sum to 1
    attn = ex * inv

    attn_ref[0] = attn.astype(attn_ref.dtype)
    ctx_ref[0] = jnp.dot(attn.astype(v_ref.dtype), v_ref[0],
                         preferred_element_type=jnp.float32).astype(ctx_ref.dtype)


def _attn_kernel_lengths(len_ref, qp_ref, kpt_ref, v_ref, w2_ref, b2_ref, ctx_ref, attn_ref):
    # Scalar-prefetched per-batch key lengths: no dense mask HBM stream; the compare also
    # kills the lane-padding columns.
    b = pl.program_id(0)
    lk_pad = kpt_ref.shape[2]
    col = jax.lax.broadcasted_iota(jnp.int32, (1, lk_pad), 1)
    kill = col >= len_ref[b]
    _attn_body(qp_ref, kpt_ref, v_ref, w2_ref, b2_ref, ctx_ref, attn_ref, kill)


def _attn_kernel_masked(qp_ref, kpt_ref, v_ref, m_ref, w2_ref, b2_ref, ctx_ref, attn_ref):
    _attn_body(qp_ref, kpt_ref, v_ref, w2_ref, b2_ref, ctx_ref, attn_ref, m_ref[0] != 0)


# --------------------------------------------------------------------------------------
# Wrapper.
# --------------------------------------------------------------------------------------

def bahdanau_attention(query, keys, values, params, mask=None, key_lengths=None, *,
                       matmul_dtype=jnp.bfloat16, energy_dtype=jnp.float32,
                       attn_dtype=jnp.float32, pad_lanes=True):
    """Pallas forward.  Returns (context [B,Lq,Dv], attention_weights [B,Lq,Lk]).

    mask:         optional dense boolean mask [B, Lq, Lk], True = masked (torch semantics).
    key_lengths:  optional per-batch valid key lengths [B] (length-mask fast path,
                  scalar-prefetched; avoids the dense mask HBM stream).
    matmul_dtype: dtype of the MXU streams (projections, context); default bf16.
    energy_dtype: dtype of qp/kpt and the tanh path; set bf16 on v6e/v7x (bf16 VPU/EUP),
                  keep f32 on v5e.  Score accumulation is always f32.
    """
    if mask is not None and key_lengths is not None:
        raise ValueError("pass either `mask` or `key_lengths`, not both")

    B, Lq, H = query.shape
    Lk = keys.shape[1]
    Dv = values.shape[2]
    A = params["wq"].shape[1]

    vmem_limit, attn_budget, proj_cap = _budgets()

    # Lane-dense outputs: pad Lk / Dv to multiples of 128 (sliced off afterwards).
    if pad_lanes:
        keys_w = _pad_dim(keys, 1, 128)
        values_w = _pad_dim(_pad_dim(values, 1, 128), 2, 128)
    else:
        keys_w, values_w = keys, values
    Lk_pad = keys_w.shape[1]
    Dv_pad = values_w.shape[2]

    # ---- Stage 1: hoisted projections -------------------------------------------------
    q2d = query.reshape(B * Lq, H).astype(matmul_dtype)
    qp = _project_rows(q2d, params["wq"].astype(matmul_dtype),
                       params["b1"].astype(jnp.float32),
                       out_dtype=energy_dtype, cap=proj_cap,
                       vmem_limit=vmem_limit).reshape(B, Lq, A)
    kpt = _project_keys_t(keys_w.astype(matmul_dtype), params["wk"].astype(matmul_dtype),
                          out_dtype=energy_dtype, vmem_limit=vmem_limit)   # (B, A, Lk_pad)
    vals = values_w.astype(matmul_dtype)

    w2 = params["w2"].reshape(A).astype(jnp.float32)     # SMEM scalars
    b2 = params["b2"].reshape(1).astype(jnp.float32)

    # ---- Stage 2: attention grid -------------------------------------------------------
    ebytes = jnp.dtype(energy_dtype).itemsize
    tq = _pick_q_tile(Lq, Lk_pad, A, Dv_pad, ebytes=ebytes,
                      budget_bytes=attn_budget, has_dense_mask=mask is not None)
    tq = _ensure_parallel_iters(tq, Lq, B)
    grid = (B, Lq // tq)

    out_shape = (jax.ShapeDtypeStruct((B, Lq, Dv_pad), jnp.float32),
                 jax.ShapeDtypeStruct((B, Lq, Lk_pad), attn_dtype))
    cparams = pltpu.CompilerParams(dimension_semantics=("parallel", "parallel"),
                                   vmem_limit_bytes=vmem_limit)

    vbytes = jnp.dtype(matmul_dtype).itemsize
    abytes = jnp.dtype(attn_dtype).itemsize
    bytes_accessed = (ebytes * (B * Lq * A + B * A * Lk_pad)
                      + vbytes * B * Lk_pad * Dv_pad
                      + 4 * B * Lq * Dv_pad + abytes * B * Lq * Lk_pad + 4 * (A + 1))
    if mask is not None:
        bytes_accessed += B * Lq * Lk_pad
    cost = pl.CostEstimate(
        flops=2 * B * Lq * Lk_pad * (A + Dv_pad) + 5 * B * Lq * Lk_pad,
        transcendentals=B * Lq * Lk_pad * A + B * Lq,
        bytes_accessed=bytes_accessed)

    if mask is None:
        # Length-mask (or no-mask) fast path via scalar prefetch.
        if key_lengths is None:
            lens = jnp.full((B,), Lk, jnp.int32)
        else:
            lens = key_lengths.astype(jnp.int32)
        qmap = lambda b, qi, lens_ref: (b, qi, 0)
        smap = lambda b, qi, lens_ref: (b, 0, 0)
        in_specs = [pl.BlockSpec((1, tq, A), qmap),
                    pl.BlockSpec((1, A, Lk_pad), smap),
                    pl.BlockSpec((1, Lk_pad, Dv_pad), smap),
                    pl.BlockSpec(memory_space=pltpu.MemorySpace.SMEM),   # w2
                    pl.BlockSpec(memory_space=pltpu.MemorySpace.SMEM)]   # b2
        out_specs = [pl.BlockSpec((1, tq, Dv_pad), qmap),
                     pl.BlockSpec((1, tq, Lk_pad), qmap)]
        grid_spec = pltpu.PrefetchScalarGridSpec(
            num_scalar_prefetch=1, grid=grid, in_specs=in_specs, out_specs=out_specs)
        kernel = _attn_kernel_lengths
        args = (lens, qp, kpt, vals, w2, b2)
    else:
        mask_i8 = mask.astype(jnp.int8)
        if Lk_pad != Lk:
            mask_i8 = jnp.pad(mask_i8, ((0, 0), (0, 0), (0, Lk_pad - Lk)),
                              constant_values=1)          # padded keys are masked
        qmap = lambda b, qi: (b, qi, 0)
        smap = lambda b, qi: (b, 0, 0)
        in_specs = [pl.BlockSpec((1, tq, A), qmap),
                    pl.BlockSpec((1, A, Lk_pad), smap),
                    pl.BlockSpec((1, Lk_pad, Dv_pad), smap),
                    pl.BlockSpec((1, tq, Lk_pad), qmap),                 # dense mask
                    pl.BlockSpec(memory_space=pltpu.MemorySpace.SMEM),
                    pl.BlockSpec(memory_space=pltpu.MemorySpace.SMEM)]
        out_specs = [pl.BlockSpec((1, tq, Dv_pad), qmap),
                     pl.BlockSpec((1, tq, Lk_pad), qmap)]
        grid_spec = pltpu.PrefetchScalarGridSpec(
            num_scalar_prefetch=0, grid=grid, in_specs=in_specs, out_specs=out_specs)
        kernel = _attn_kernel_masked
        args = (qp, kpt, vals, mask_i8, w2, b2)

    ctx, attn = pl.pallas_call(
        kernel, out_shape=out_shape, grid_spec=grid_spec,
        compiler_params=cparams, cost_estimate=cost,
    )(*args)

    if Dv_pad != Dv:
        ctx = ctx[..., :Dv]
    if Lk_pad != Lk:
        attn = attn[..., :Lk]
    return ctx, attn


# --------------------------------------------------------------------------------------
# Params + pure-JAX reference (faithful to the PyTorch concat formulation).
# --------------------------------------------------------------------------------------

def init_params(key, hidden_dim, attention_dim):
    """Torch Linear1: weight (A, 2H), bias (A,); Linear2: weight (1, A), bias (1,).
    Linear1 weight stored transposed and split into the query/key halves."""
    k1, k2, k3, k4 = jax.random.split(key, 4)
    H, A = hidden_dim, attention_dim
    lim1 = 1.0 / jnp.sqrt(2.0 * H)
    lim2 = 1.0 / jnp.sqrt(float(A))
    w1 = jax.random.uniform(k1, (2 * H, A), jnp.float32, -lim1, lim1)   # = W1^T
    b1 = jax.random.uniform(k2, (1, A), jnp.float32, -lim1, lim1)
    w2 = jax.random.uniform(k3, (1, A), jnp.float32, -lim2, lim2)       # = W2 (1, A)
    b2 = jax.random.uniform(k4, (1, 1), jnp.float32, -lim2, lim2)
    return {"wq": w1[:H, :], "wk": w1[H:, :], "b1": b1, "w2": w2, "b2": b2}


def reference(query, keys, values, params, mask=None):
    B, Lq, H = query.shape
    Lk = keys.shape[1]
    qe = jnp.broadcast_to(query[:, :, None, :], (B, Lq, Lk, H))
    ke = jnp.broadcast_to(keys[:, None, :, :], (B, Lq, Lk, H))
    qk = jnp.concatenate([qe, ke], axis=-1)                          # (B,Lq,Lk,2H)
    w1 = jnp.concatenate([params["wq"], params["wk"]], axis=0)       # (2H, A)
    h = jnp.tanh(qk @ w1 + params["b1"][0])                          # (B,Lq,Lk,A)
    scores = h @ params["w2"][0] + params["b2"][0, 0]                # (B,Lq,Lk)
    if mask is not None:
        scores = jnp.where(mask, -jnp.inf, scores)
    attn = jax.nn.softmax(scores, axis=-1)
    ctx = jnp.einsum("bqk,bkd->bqd", attn, values)
    return ctx, attn


if __name__ == "__main__":
    B, Lq, Lk, H, A, Dv = 2, 8, 8, 32, 32, 32

    key = jax.random.PRNGKey(0)
    kq, kk, kv, kparam = jax.random.split(key, 4)
    query = jax.random.normal(kq, (B, Lq, H), jnp.float32)
    keys = jax.random.normal(kk, (B, Lk, H), jnp.float32)
    values = jax.random.normal(kv, (B, Lk, Dv), jnp.float32)
    params = init_params(kparam, H, A)

    # 1) f32 path, no mask -> tight check against the reference.
    ctx, attn = bahdanau_attention(query, keys, values, params,
                                   matmul_dtype=jnp.float32, energy_dtype=jnp.float32)
    jax.block_until_ready((ctx, attn))
    ctx_r, attn_r = reference(query, keys, values, params)
    assert ctx.shape == (B, Lq, Dv) and attn.shape == (B, Lq, Lk)
    assert jnp.allclose(ctx, ctx_r, atol=2e-3, rtol=2e-3), "context mismatch (f32, no mask)"
    assert jnp.allclose(attn, attn_r, atol=2e-3, rtol=2e-3), "attn mismatch (f32, no mask)"

    # 2) f32 path, scalar-prefetched key lengths (no dense mask HBM stream).
    lens = jnp.array([5, 7], jnp.int32)
    mask = jnp.broadcast_to(jnp.arange(Lk)[None, None, :] >= lens[:, None, None], (B, Lq, Lk))
    ctx_l, attn_l = bahdanau_attention(query, keys, values, params, key_lengths=lens,
                                       matmul_dtype=jnp.float32, energy_dtype=jnp.float32)
    jax.block_until_ready((ctx_l, attn_l))
    ctx_lr, attn_lr = reference(query, keys, values, params, mask=mask)
    assert jnp.allclose(ctx_l, ctx_lr, atol=2e-3, rtol=2e-3), "context mismatch (lengths)"
    assert jnp.allclose(attn_l, attn_lr, atol=2e-3, rtol=2e-3), "attn mismatch (lengths)"

    # 3) default bf16 MXU streams + bf16 energy path (v6e/v7x mode), dense boolean mask.
    ctx_m, attn_m = bahdanau_attention(query, keys, values, params, mask=mask,
                                       energy_dtype=jnp.bfloat16)
    jax.block_until_ready((ctx_m, attn_m))
    assert jnp.allclose(ctx_m, ctx_lr, atol=5e-2, rtol=5e-2), "context mismatch (bf16, mask)"
    assert jnp.allclose(attn_m, attn_lr, atol=5e-2, rtol=5e-2), "attn mismatch (bf16, mask)"

    print("KERNEL_OK")
</pallas_src>

<mosaic_0001>
module attributes {stable_mosaic.version = 11 : i64} {
  func.func @_proj_bias_kernel(%arg0: i32, %arg1: memref<16x32xf32, #tpu.memory_space<vmem>>, %arg2: memref<32x32xf32, #tpu.memory_space<vmem>>, %arg3: memref<1x32xf32, #tpu.memory_space<vmem>>, %arg4: memref<16x32xf32, #tpu.memory_space<vmem>>) attributes {dimension_semantics = [#tpu.dimension_semantics<parallel>], iteration_bounds = array<i64: 1>, scalar_prefetch = 0 : i64, scratch_operands = 0 : i64, tpu.core_type = #tpu.core_type<tc>, window_params = [{transform_indices = @transform_0, window_bounds = array<i64: 16, 32>}, {pipeline_mode = #tpu.pipeline_mode<synchronous>, transform_indices = @transform_1, window_bounds = array<i64: 32, 32>}, {pipeline_mode = #tpu.pipeline_mode<synchronous>, transform_indices = @transform_2, window_bounds = array<i64: 1, 32>}, {transform_indices = @transform_3, window_bounds = array<i64: 16, 32>}]} {
    %c0 = arith.constant 0 : index
    %c0_0 = arith.constant 0 : index
    %0 = vector.load %arg1[%c0, %c0_0] : memref<16x32xf32, #tpu.memory_space<vmem>>, vector<16x32xf32>
    %c0_1 = arith.constant 0 : index
    %c0_2 = arith.constant 0 : index
    %1 = vector.load %arg2[%c0_1, %c0_2] : memref<32x32xf32, #tpu.memory_space<vmem>>, vector<32x32xf32>
    %cst = arith.constant dense<0.000000e+00> : vector<16x32xf32>
    %2 = tpu.matmul %0, %1, %cst {dimension_numbers = #tpu.dot_dimension_numbers<[1], [0], [0], [1], [0, 0, 1, 1], [], []>} : vector<16x32xf32>, vector<32x32xf32>, vector<16x32xf32> -> vector<16x32xf32>
    %c0_3 = arith.constant 0 : index
    %c0_4 = arith.constant 0 : index
    %3 = vector.load %arg3[%c0_3, %c0_4] : memref<1x32xf32, #tpu.memory_space<vmem>>, vector<1x32xf32>
    %4 = vector.broadcast %3 : vector<1x32xf32> to vector<16x32xf32>
    %5 = arith.addf %2, %4 : vector<16x32xf32>
    %c0_5 = arith.constant 0 : index
    %c0_6 = arith.constant 0 : index
    %6 = vector.load %arg4[%c0_5, %c0_6] : memref<16x32xf32, #tpu.memory_space<vmem>>, vector<16x32xf32>
    tpu.vector_store %arg4[%c0_5, %c0_6], %5 {strides = array<i32>} : memref<16x32xf32, #tpu.memory_space<vmem>>, vector<16x32xf32>,
    return
  }
  func.func @transform_0(%arg0: i32) -> (i32, i32) {
    %c0_i32 = arith.constant 0 : i32
    %c0_i32_0 = arith.constant 0 : i32
    return %arg0, %c0_i32 : i32, i32
  }
  func.func @transform_1(%arg0: i32) -> (i32, i32) {
    %c0_i32 = arith.constant 0 : i32
    %c0_i32_0 = arith.constant 0 : i32
    %c0_i32_1 = arith.constant 0 : i32
    return %c0_i32, %c0_i32_0 : i32, i32
  }
  func.func @transform_2(%arg0: i32) -> (i32, i32) {
    %c0_i32 = arith.constant 0 : i32
    %c0_i32_0 = arith.constant 0 : i32
    %c0_i32_1 = arith.constant 0 : i32
    return %c0_i32, %c0_i32_0 : i32, i32
  }
  func.func @transform_3(%arg0: i32) -> (i32, i32) {
    %c0_i32 = arith.constant 0 : i32
    %c0_i32_0 = arith.constant 0 : i32
    return %arg0, %c0_i32 : i32, i32
  }
}

</mosaic_0001>

<llo_original>
// kernel: tpu_custom_call.1
$region0: #{tpu_custom_call.1}
  #allocation0 [shape = 'u32[]', space=smem, size = 0x4, offset = 0x4, fixed_abs, tag = 'smem constant byte address 0x4 - core index']
  #allocation1 [shape = 'u32[72,128]{1,0:T(1,128)}', space=vmem, size = 0x9000, scoped, tag = 'internal scratch']
  %s0 = inlined_call_operand.hbm [shape: f32[16,32], index: 0, kind: input, shape index: {}]
  %s1 = inlined_call_operand.hbm [shape: f32[32,32], index: 1, kind: input, shape index: {}]
  %s2 = inlined_call_operand.vmem [shape: f32[1,32], index: 2, kind: input, shape index: {}]
  %s3 = inlined_call_operand.hbm [shape: f32[16,32], index: 3, kind: output, shape index: {}]
  %s4 = sld [smem:[#allocation0]]
  $region30: #{tpu_custom_call.1} parent=0
    _
  %s6 = ssub.s32 1, %s4
  %s7 = scalar_select 0, %s6, %s4
  $region1: #{tpu_custom_call.1} parent=0
    #allocation2 [shape = 'u8[8192]{0}', space=vmem, size = 0x2000, scoped, tag = 'input window, operand 0, single buffered']
    #allocation3 [shape = 's32[1]{0}', space=sflag, size = 0x4, scoped, tag = 'scoped memory for tpu_custom_call.1']
    #allocation4 [shape = 's32[1]{0}', space=sflag, size = 0x4, scoped, tag = 'scoped memory for tpu_custom_call.1']
    #allocation5 [shape = 'u8[16384]{0}', space=vmem, size = 0x4000, scoped, tag = 'input window, operand 1, single buffered']
    #allocation6 [shape = 's32[1]{0}', space=sflag, size = 0x4, scoped, tag = 'scoped memory for tpu_custom_call.1']
    #allocation7 [shape = 'u8[8192]{0}', space=vmem, size = 0x2000, scoped, tag = 'output window, operand 0, single buffered']
    %8 = vsyncpa [#allocation3], 0
    %9 = vsyncpa [#allocation6], 0
    %10 = vsyncpa [#allocation4], 0
    // Predicated region
    $region2: #{tpu_custom_call.1} parent=1 // pred_check
      _
    $region3: #{tpu_custom_call.1} parent=1 // pred_check_branch
      %12 = sbr.rel (0) target = $region5
    $region4: #{tpu_custom_call.1} parent=1 // pred_region
      %14 = vsyncadd [#allocation3], 0
      %s15 = sshll.u32 %s0, 4
      %s16 = int_to_ptr.hbm [resolvable:$true] %s15
      %s17 = sshll.u32 [#allocation2], 4
      %s18 = int_to_ptr.vmem [resolvable:$true] %s17
      %23 = dma.hbm_to_vmem [thread:$0]  %s16, 256, %s18, [#allocation3], 128, 128, 8
    $region5: #{tpu_custom_call.1} parent=1 // pred_fallthru
      _
    // Predicated region
    $region6: #{tpu_custom_call.1} parent=1 // pred_check
      _
    $region7: #{tpu_custom_call.1} parent=1 // pred_check_branch
      %25 = sbr.rel (0) target = $region9
    $region8: #{tpu_custom_call.1} parent=1 // pred_region
      %27 = vsyncadd [#allocation6], 0
      %s28 = sshll.u32 %s1, 4
      %s29 = int_to_ptr.hbm [resolvable:$true] %s28
      %s30 = sshll.u32 [#allocation5], 4
      %s31 = int_to_ptr.vmem [resolvable:$true] %s30
      %36 = dma.hbm_to_vmem [thread:$0]  %s29, 512, %s31, [#allocation6], 128, 128, 8
    $region9: #{tpu_custom_call.1} parent=1 // pred_fallthru
      _
    // Predicated region
    $region10: #{tpu_custom_call.1} parent=1 // pred_check
      _
    $region11: #{tpu_custom_call.1} parent=1 // pred_check_branch
      %38 = sbr.rel (0) target = $region13
    $region12: #{tpu_custom_call.1} parent=1 // pred_region
      _
    $region13: #{tpu_custom_call.1} parent=1 // pred_fallthru
      _
    // Predicated region
    $region14: #{tpu_custom_call.1} parent=1 // pred_check
      _
    $region15: #{tpu_custom_call.1} parent=1 // pred_check_branch
      %40 = sbr.rel (0) target = $region17
    $region16: #{tpu_custom_call.1} parent=1 // pred_region
      %42 = dma.done [#allocation3], 256
    $region17: #{tpu_custom_call.1} parent=1 // pred_fallthru
      _
    // Predicated region
    $region18: #{tpu_custom_call.1} parent=1 // pred_check
      _
    $region19: #{tpu_custom_call.1} parent=1 // pred_check_branch
      %44 = sbr.rel (0) target = $region21
    $region20: #{tpu_custom_call.1} parent=1 // pred_region
      %46 = dma.done [#allocation6], 512
    $region21: #{tpu_custom_call.1} parent=1 // pred_fallthru
      _
    %v47 = vld [vmem:[#allocation2] sm:$0xff]
    %v48 = vld [vmem:[#allocation2 + $0x8] sm:$0xff]
    %v49 = vld [vmem:[#allocation5] sm:$0xff]
    %v50 = vld [vmem:[#allocation5 + $0x8] sm:$0xff]
    %v51 = vld [vmem:[#allocation5 + $0x10] sm:$0xff]
    %v52 = vld [vmem:[#allocation5 + $0x18] sm:$0xff]
    %v53 = vld [vmem:[%s2] sm:$0x1]
    %v55 = vperm.slane %v53, 0
    %vm57 = vcmask 261120
    %v59 = vsel %vm57, %v47, 0
    %v62 = vsel %vm57, %v48, 0
    %64 = vmatpush.msra.mxu0 0.0
    %65 = vmatpush.msra.mxu0 0.0
    %66 = vmatpush.msra.mxu0 0.0
    %67 = vmatpush.msra.mxu0 0.0
    %68 = vmatpush.msra.mxu0 0.0
    %69 = vmatpush.msra.mxu0 0.0
    %70 = vmatpush.msra.mxu0 0.0
    %71 = vmatpush.msra.mxu0 0.0
    %72 = vmatpush.msra.mxu0 0.0
    %73 = vmatpush.msra.mxu0 0.0
    %74 = vmatpush.msra.mxu0 0.0
    %75 = vmatpush.msra.mxu0 0.0
    %76 = vmatpush.msra.mxu0 %v52
    %77 = vmatpush.msra.mxu0 %v51
    %78 = vmatpush.msra.mxu0 %v50
    %79 = vmatpush.msra.mxu0 %v49
    %80 = vmatmul.f32.gmra.mxu0 %v59
    %v81 = vpop.f32.mrf.mxu0
    %v82 = vadd.f32 %v55, %v81
    %83 = vmatmul.f32.gmra.mxu0 %v62
    %v84 = vpop.f32.mrf.mxu0
    %v85 = vadd.f32 %v55, %v84
    %86 = vdwg.mxu0
    %87 = vst.msk [vmem:[#allocation7] sm:$0xff] %vm57, %v82
    %88 = vst.msk [vmem:[#allocation7 + $0x8] sm:$0xff] %vm57, %v85
    // Predicated region
    $region22: #{tpu_custom_call.1} parent=1 // pred_check
      _
    $region23: #{tpu_custom_call.1} parent=1 // pred_check_branch
      %90 = sbr.rel (0) target = $region25
    $region24: #{tpu_custom_call.1} parent=1 // pred_region
      %92 = vsyncadd [#allocation4], 0
      %s93 = sshll.u32 [#allocation7], 4
      %s94 = int_to_ptr.vmem [resolvable:$true] %s93
      %s95 = sshll.u32 %s3, 4
      %s96 = int_to_ptr.hbm [resolvable:$true] %s95
      %101 = dma.vmem_to_hbm [thread:$0]  %s94, 256, %s96, [#allocation4], 128, 128, 8
    $region25: #{tpu_custom_call.1} parent=1 // pred_fallthru
      _
    // Predicated region
    $region26: #{tpu_custom_call.1} parent=1 // pred_check
      _
    $region27: #{tpu_custom_call.1} parent=1 // pred_check_branch
      %103 = sbr.rel (0) target = $region29
    $region28: #{tpu_custom_call.1} parent=1 // pred_region
      %105 = dma.done [#allocation4], 256
    $region29: #{tpu_custom_call.1} parent=1 // pred_fallthru
      _
    %106 = vsyncpa [#allocation3], 1
    %107 = vsyncpa [#allocation6], 1
    %108 = vsyncpa [#allocation4], 1

</llo_original>
